<compile_context>
chip_gen: v7x
topology: tpu7x:2x2x1
jax: 0.10.0
libtpu: 0.0.40
codegen_flags: <defaults>
</compile_context>

<pallas_src>
import jax
import jax.numpy as jnp
from jax.experimental import pallas as pl
from jax.experimental.pallas import tpu as pltpu

SUBLANE = 8  # batch tiles must be a multiple of the sublane count


def _round_up(n, m):
    return ((n + m - 1) // m) * m


def mlp_kernel(x_ref, w1_ref, b1_ref, w2_ref, b2_ref, w3_ref, b3_ref, o_ref):
    # Layer 1: (tm, 32) @ (32, 64) -> bias -> ReLU.  All dots accumulate in f32.
    h = jnp.dot(x_ref[...], w1_ref[...], preferred_element_type=jnp.float32)
    h = jnp.maximum(h + b1_ref[...], 0.0)
    # Layer 2: (tm, 64) @ (64, 64) -> bias -> ReLU.
    h = jnp.dot(h, w2_ref[...], preferred_element_type=jnp.float32)
    h = jnp.maximum(h + b2_ref[...], 0.0)
    # Output layer: (tm, 64) @ (64, 8) -> bias, no activation.
    out = jnp.dot(h, w3_ref[...], preferred_element_type=jnp.float32)
    o_ref[...] = (out + b3_ref[...]).astype(o_ref.dtype)


def low_level_policy_forward(x, params, *, tm=256):
    """Fused MLP forward.

    x:      (batch, input_size) float32
    params: [(W1, b1), (W2, b2), (W3, b3)] with W as (in, out), b as (1, out), all float32.
    Returns (batch, output_size) float32 == PyTorch LowLevelPolicy(x).
    """
    (w1, b1), (w2, b2), (w3, b3) = params
    batch, in_size = x.shape
    h1, h2, out_size = w1.shape[1], w2.shape[1], w3.shape[1]

    # Batch tile: multiple of 8 sublanes, clamped to the batch size.
    tm = max(SUBLANE, min(tm, _round_up(batch, SUBLANE)))
    tm = _round_up(tm, SUBLANE)
    batch_p = _round_up(batch, tm)
    nb = batch_p // tm

    # Only the batch (row) dim is ever padded, and only for ragged batches.
    x_in = jnp.pad(x, ((0, batch_p - batch), (0, 0))) if batch_p != batch else x

    vmem = pltpu.MemorySpace.VMEM
    # x / out: tiled over the batch grid axis (full feature dims, no lane padding).
    x_spec = pl.BlockSpec((tm, in_size), lambda i: (i, 0), memory_space=vmem)
    out_spec = pl.BlockSpec((tm, out_size), lambda i: (i, 0), memory_space=vmem)
    # Weights/biases: constant block index -> DMA'd once, VMEM-resident for all tiles.
    const = lambda arr: pl.BlockSpec(arr.shape, lambda i: (0, 0), memory_space=vmem)

    flops = 2 * batch_p * (in_size * h1 + h1 * h2 + h2 * out_size)
    param_bytes = sum(int(a.size) * a.dtype.itemsize for a in (w1, b1, w2, b2, w3, b3))
    bytes_accessed = batch_p * in_size * 4 + batch_p * out_size * 4 + param_bytes

    out = pl.pallas_call(
        mlp_kernel,
        out_shape=jax.ShapeDtypeStruct((batch_p, out_size), jnp.float32),
        grid=(nb,),
        in_specs=[
            x_spec,
            const(w1), const(b1),
            const(w2), const(b2),
            const(w3), const(b3),
        ],
        out_specs=out_spec,
        compiler_params=pltpu.CompilerParams(
            dimension_semantics=("parallel",),  # batch tiles split across TCs on v7x
        ),
        cost_estimate=pl.CostEstimate(
            flops=flops, transcendentals=0, bytes_accessed=bytes_accessed),
    )(x_in, w1, b1, w2, b2, w3, b3)

    return out[:batch] if batch_p != batch else out


def init_linear(key, fan_in, fan_out):
    """Deterministic init mimicking PyTorch nn.Linear default (uniform +-1/sqrt(fan_in))."""
    kw, kb = jax.random.split(key)
    bound = 1.0 / jnp.sqrt(jnp.float32(fan_in))
    w = jax.random.uniform(kw, (fan_in, fan_out), jnp.float32, -bound, bound)
    b = jax.random.uniform(kb, (1, fan_out), jnp.float32, -bound, bound)
    return w, b


def reference_mlp(x, params):
    """Pure-JAX float32 reference (same math as the PyTorch module)."""
    h = x
    n = len(params)
    for i, (w, b) in enumerate(params):
        h = jnp.dot(h, w, preferred_element_type=jnp.float32) + b
        if i < n - 1:
            h = jnp.maximum(h, 0.0)
    return h


if __name__ == "__main__":
    # LowLevelPolicy(input_size=32, output_size=8, hidden_layers=[64, 64])
    input_size, output_size, hidden_layers = 32, 8, [64, 64]

    key = jax.random.PRNGKey(0)
    kx, k1, k2, k3 = jax.random.split(key, 4)
    # Params built once (hoisted out of the per-call path).
    params = [
        init_linear(k1, input_size, hidden_layers[0]),
        init_linear(k2, hidden_layers[0], hidden_layers[1]),
        init_linear(k3, hidden_layers[1], output_size),
    ]

    # Small batch: single 16-row tile, weights DMA'd once and held in VMEM.
    batch = 16
    x = jax.random.normal(kx, (batch, input_size), jnp.float32)
    out = jax.block_until_ready(low_level_policy_forward(x, params))
    ref = reference_mlp(x, params)
    assert out.shape == (batch, output_size)
    # Tolerance covers MXU default-precision f32 matmul (bf16-pass emulation).
    assert jnp.allclose(out, ref, atol=1e-2, rtol=1e-2), "mismatch vs reference MLP"

    # Ragged batch: exercises the batch-padding path (7 -> 8 rows).
    x_small = jax.random.normal(kx, (7, input_size), jnp.float32)
    out_small = jax.block_until_ready(low_level_policy_forward(x_small, params))
    ref_small = reference_mlp(x_small, params)
    assert out_small.shape == (7, output_size)
    assert jnp.allclose(out_small, ref_small, atol=1e-2, rtol=1e-2), "mismatch vs reference (ragged)"

    print("KERNEL_OK")
</pallas_src>

<mosaic_0001>
module attributes {stable_mosaic.version = 11 : i64} {
  func.func @mlp_kernel(%arg0: i32, %arg1: memref<16x32xf32, #tpu.memory_space<vmem>>, %arg2: memref<32x64xf32, #tpu.memory_space<vmem>>, %arg3: memref<1x64xf32, #tpu.memory_space<vmem>>, %arg4: memref<64x64xf32, #tpu.memory_space<vmem>>, %arg5: memref<1x64xf32, #tpu.memory_space<vmem>>, %arg6: memref<64x8xf32, #tpu.memory_space<vmem>>, %arg7: memref<1x8xf32, #tpu.memory_space<vmem>>, %arg8: memref<16x8xf32, #tpu.memory_space<vmem>>) attributes {dimension_semantics = [#tpu.dimension_semantics<parallel>], iteration_bounds = array<i64: 1>, scalar_prefetch = 0 : i64, scratch_operands = 0 : i64, tpu.core_type = #tpu.core_type<tc>, window_params = [{transform_indices = @transform_0, window_bounds = array<i64: 16, 32>}, {pipeline_mode = #tpu.pipeline_mode<synchronous>, transform_indices = @transform_1, window_bounds = array<i64: 32, 64>}, {pipeline_mode = #tpu.pipeline_mode<synchronous>, transform_indices = @transform_2, window_bounds = array<i64: 1, 64>}, {pipeline_mode = #tpu.pipeline_mode<synchronous>, transform_indices = @transform_3, window_bounds = array<i64: 64, 64>}, {pipeline_mode = #tpu.pipeline_mode<synchronous>, transform_indices = @transform_4, window_bounds = array<i64: 1, 64>}, {pipeline_mode = #tpu.pipeline_mode<synchronous>, transform_indices = @transform_5, window_bounds = array<i64: 64, 8>}, {pipeline_mode = #tpu.pipeline_mode<synchronous>, transform_indices = @transform_6, window_bounds = array<i64: 1, 8>}, {transform_indices = @transform_7, window_bounds = array<i64: 16, 8>}]} {
    %c0 = arith.constant 0 : index
    %c0_0 = arith.constant 0 : index
    %0 = vector.load %arg1[%c0, %c0_0] : memref<16x32xf32, #tpu.memory_space<vmem>>, vector<16x32xf32>
    %c0_1 = arith.constant 0 : index
    %c0_2 = arith.constant 0 : index
    %1 = vector.load %arg2[%c0_1, %c0_2] : memref<32x64xf32, #tpu.memory_space<vmem>>, vector<32x64xf32>
    %cst = arith.constant dense<0.000000e+00> : vector<16x64xf32>
    %2 = tpu.matmul %0, %1, %cst {dimension_numbers = #tpu.dot_dimension_numbers<[1], [0], [0], [1], [0, 0, 1, 1], [], []>} : vector<16x32xf32>, vector<32x64xf32>, vector<16x64xf32> -> vector<16x64xf32>
    %c0_3 = arith.constant 0 : index
    %c0_4 = arith.constant 0 : index
    %3 = vector.load %arg3[%c0_3, %c0_4] : memref<1x64xf32, #tpu.memory_space<vmem>>, vector<1x64xf32>
    %4 = vector.broadcast %3 : vector<1x64xf32> to vector<16x64xf32>
    %5 = arith.addf %2, %4 : vector<16x64xf32>
    %cst_5 = arith.constant 0.000000e+00 : f32
    %6 = vector.broadcast %cst_5 : f32 to vector<16x64xf32>
    %7 = arith.maximumf %5, %6 : vector<16x64xf32>
    %c0_6 = arith.constant 0 : index
    %c0_7 = arith.constant 0 : index
    %8 = vector.load %arg4[%c0_6, %c0_7] : memref<64x64xf32, #tpu.memory_space<vmem>>, vector<64x64xf32>
    %cst_8 = arith.constant dense<0.000000e+00> : vector<16x64xf32>
    %9 = tpu.matmul %7, %8, %cst_8 {dimension_numbers = #tpu.dot_dimension_numbers<[1], [0], [0], [1], [0, 0, 1, 1], [], []>} : vector<16x64xf32>, vector<64x64xf32>, vector<16x64xf32> -> vector<16x64xf32>
    %c0_9 = arith.constant 0 : index
    %c0_10 = arith.constant 0 : index
    %10 = vector.load %arg5[%c0_9, %c0_10] : memref<1x64xf32, #tpu.memory_space<vmem>>, vector<1x64xf32>
    %11 = vector.broadcast %10 : vector<1x64xf32> to vector<16x64xf32>
    %12 = arith.addf %9, %11 : vector<16x64xf32>
    %cst_11 = arith.constant 0.000000e+00 : f32
    %13 = vector.broadcast %cst_11 : f32 to vector<16x64xf32>
    %14 = arith.maximumf %12, %13 : vector<16x64xf32>
    %c0_12 = arith.constant 0 : index
    %c0_13 = arith.constant 0 : index
    %15 = vector.load %arg6[%c0_12, %c0_13] : memref<64x8xf32, #tpu.memory_space<vmem>>, vector<64x8xf32>
    %cst_14 = arith.constant dense<0.000000e+00> : vector<16x8xf32>
    %16 = tpu.matmul %14, %15, %cst_14 {dimension_numbers = #tpu.dot_dimension_numbers<[1], [0], [0], [1], [0, 0, 1, 1], [], []>} : vector<16x64xf32>, vector<64x8xf32>, vector<16x8xf32> -> vector<16x8xf32>
    %c0_15 = arith.constant 0 : index
    %c0_16 = arith.constant 0 : index
    %17 = vector.load %arg7[%c0_15, %c0_16] : memref<1x8xf32, #tpu.memory_space<vmem>>, vector<1x8xf32>
    %18 = vector.broadcast %17 : vector<1x8xf32> to vector<16x8xf32>
    %19 = arith.addf %16, %18 : vector<16x8xf32>
    %c0_17 = arith.constant 0 : index
    %c0_18 = arith.constant 0 : index
    %20 = vector.load %arg8[%c0_17, %c0_18] : memref<16x8xf32, #tpu.memory_space<vmem>>, vector<16x8xf32>
    tpu.vector_store %arg8[%c0_17, %c0_18], %19 {strides = array<i32>} : memref<16x8xf32, #tpu.memory_space<vmem>>, vector<16x8xf32>,
    return
  }
  func.func @transform_0(%arg0: i32) -> (i32, i32) {
    %c0_i32 = arith.constant 0 : i32
    %c0_i32_0 = arith.constant 0 : i32
    return %arg0, %c0_i32 : i32, i32
  }
  func.func @transform_1(%arg0: i32) -> (i32, i32) {
    %c0_i32 = arith.constant 0 : i32
    %c0_i32_0 = arith.constant 0 : i32
    %c0_i32_1 = arith.constant 0 : i32
    return %c0_i32, %c0_i32_0 : i32, i32
  }
  func.func @transform_2(%arg0: i32) -> (i32, i32) {
    %c0_i32 = arith.constant 0 : i32
    %c0_i32_0 = arith.constant 0 : i32
    %c0_i32_1 = arith.constant 0 : i32
    return %c0_i32, %c0_i32_0 : i32, i32
  }
  func.func @transform_3(%arg0: i32) -> (i32, i32) {
    %c0_i32 = arith.constant 0 : i32
    %c0_i32_0 = arith.constant 0 : i32
    %c0_i32_1 = arith.constant 0 : i32
    return %c0_i32, %c0_i32_0 : i32, i32
  }
  func.func @transform_4(%arg0: i32) -> (i32, i32) {
    %c0_i32 = arith.constant 0 : i32
    %c0_i32_0 = arith.constant 0 : i32
    %c0_i32_1 = arith.constant 0 : i32
    return %c0_i32, %c0_i32_0 : i32, i32
  }
  func.func @transform_5(%arg0: i32) -> (i32, i32) {
    %c0_i32 = arith.constant 0 : i32
    %c0_i32_0 = arith.constant 0 : i32
    %c0_i32_1 = arith.constant 0 : i32
    return %c0_i32, %c0_i32_0 : i32, i32
  }
  func.func @transform_6(%arg0: i32) -> (i32, i32) {
    %c0_i32 = arith.constant 0 : i32
    %c0_i32_0 = arith.constant 0 : i32
    %c0_i32_1 = arith.constant 0 : i32
    return %c0_i32, %c0_i32_0 : i32, i32
  }
  func.func @transform_7(%arg0: i32) -> (i32, i32) {
    %c0_i32 = arith.constant 0 : i32
    %c0_i32_0 = arith.constant 0 : i32
    return %arg0, %c0_i32 : i32, i32
  }
}

</mosaic_0001>

<llo_original>
// kernel: tpu_custom_call.1
$region0: #{tpu_custom_call.1}
  #allocation0 [shape = 'u32[]', space=smem, size = 0x4, offset = 0x4, fixed_abs, tag = 'smem constant byte address 0x4 - core index']
  #allocation1 [shape = 'u32[144,128]{1,0:T(1,128)}', space=vmem, size = 0x12000, scoped, tag = 'internal scratch']
  %s0 = inlined_call_operand.vmem [shape: f32[16,32], index: 0, kind: input, shape index: {}]
  %s1 = inlined_call_operand.hbm [shape: f32[32,64], index: 1, kind: input, shape index: {}]
  %s2 = inlined_call_operand.vmem [shape: f32[1,64], index: 2, kind: input, shape index: {}]
  %s3 = inlined_call_operand.vmem [shape: f32[64,64], index: 3, kind: input, shape index: {}]
  %s4 = inlined_call_operand.vmem [shape: f32[1,64], index: 4, kind: input, shape index: {}]
  %s5 = inlined_call_operand.vmem [shape: f32[64,8], index: 5, kind: input, shape index: {}]
  %s6 = inlined_call_operand.vmem [shape: f32[1,8], index: 6, kind: input, shape index: {}]
  %s7 = inlined_call_operand.vmem [shape: f32[16,8], index: 7, kind: output, shape index: {}]
  %s8 = sld [smem:[#allocation0]]
  $region42: #{tpu_custom_call.1} parent=0
    _
  %s10 = ssub.s32 1, %s8
  %s11 = scalar_select 0, %s10, %s8
  $region1: #{tpu_custom_call.1} parent=0
    #allocation2 [shape = 'u8[16384]{0}', space=vmem, size = 0x4000, scoped, tag = 'input window, operand 1, single buffered']
    #allocation3 [shape = 's32[1]{0}', space=sflag, size = 0x4, scoped, tag = 'scoped memory for tpu_custom_call.1']
    %12 = vsyncpa [#allocation3], 0
    // Predicated region
    $region2: #{tpu_custom_call.1} parent=1 // pred_check
      _
    $region3: #{tpu_custom_call.1} parent=1 // pred_check_branch
      %14 = sbr.rel (0) target = $region5
    $region4: #{tpu_custom_call.1} parent=1 // pred_region
      _
    $region5: #{tpu_custom_call.1} parent=1 // pred_fallthru
      _
    // Predicated region
    $region6: #{tpu_custom_call.1} parent=1 // pred_check
      _
    $region7: #{tpu_custom_call.1} parent=1 // pred_check_branch
      %16 = sbr.rel (0) target = $region9
    $region8: #{tpu_custom_call.1} parent=1 // pred_region
      %s18 = ssub.s32 512, 512
      %19 = vsyncadd [#allocation3], %s18
      %s20 = sshll.u32 [#allocation2], 4
      %s21 = int_to_ptr.vmem [resolvable:$true] %s20
      %26 = dma.hbm_to_vmem [thread:$0]  %s1, 512, %s21, [#allocation3], 128, 128, 8
    $region9: #{tpu_custom_call.1} parent=1 // pred_fallthru
      _
    // Predicated region
    $region10: #{tpu_custom_call.1} parent=1 // pred_check
      _
    $region11: #{tpu_custom_call.1} parent=1 // pred_check_branch
      %28 = sbr.rel (0) target = $region13
    $region12: #{tpu_custom_call.1} parent=1 // pred_region
      _
    $region13: #{tpu_custom_call.1} parent=1 // pred_fallthru
      _
    // Predicated region
    $region14: #{tpu_custom_call.1} parent=1 // pred_check
      _
    $region15: #{tpu_custom_call.1} parent=1 // pred_check_branch
      %30 = sbr.rel (0) target = $region17
    $region16: #{tpu_custom_call.1} parent=1 // pred_region
      _
    $region17: #{tpu_custom_call.1} parent=1 // pred_fallthru
      _
    // Predicated region
    $region18: #{tpu_custom_call.1} parent=1 // pred_check
      _
    $region19: #{tpu_custom_call.1} parent=1 // pred_check_branch
      %32 = sbr.rel (0) target = $region21
    $region20: #{tpu_custom_call.1} parent=1 // pred_region
      _
    $region21: #{tpu_custom_call.1} parent=1 // pred_fallthru
      _
    // Predicated region
    $region22: #{tpu_custom_call.1} parent=1 // pred_check
      _
    $region23: #{tpu_custom_call.1} parent=1 // pred_check_branch
      %34 = sbr.rel (0) target = $region25
    $region24: #{tpu_custom_call.1} parent=1 // pred_region
      _
    $region25: #{tpu_custom_call.1} parent=1 // pred_fallthru
      _
    // Predicated region
    $region26: #{tpu_custom_call.1} parent=1 // pred_check
      _
    $region27: #{tpu_custom_call.1} parent=1 // pred_check_branch
      %36 = sbr.rel (0) target = $region29
    $region28: #{tpu_custom_call.1} parent=1 // pred_region
      _
    $region29: #{tpu_custom_call.1} parent=1 // pred_fallthru
      _
    // Predicated region
    $region30: #{tpu_custom_call.1} parent=1 // pred_check
      _
    $region31: #{tpu_custom_call.1} parent=1 // pred_check_branch
      %38 = sbr.rel (0) target = $region33
    $region32: #{tpu_custom_call.1} parent=1 // pred_region
      %39 = dma.done [#allocation3], 512
    $region33: #{tpu_custom_call.1} parent=1 // pred_fallthru
      _
    %v40 = vld [vmem:[%s0] sm:$0xff]
    %v41 = vld [vmem:[%s0 + $0x8] sm:$0xff]
    %v42 = vld [vmem:[#allocation2] sm:$0xff]
    %v43 = vld [vmem:[#allocation2 + $0x8] sm:$0xff]
    %v44 = vld [vmem:[#allocation2 + $0x10] sm:$0xff]
    %v45 = vld [vmem:[#allocation2 + $0x18] sm:$0xff]
    %v46 = vld [vmem:[%s2] sm:$0x1]
    %v48 = vlaneseq
    %v49 = vshrl.u32 %v48, 7
    %v50 = vsub.s32 0, %v49
    %v51 = vrot.slane %v46, %v50
    %vm53 = vcmask 261120
    %v55 = vsel %vm53, %v40, 0
    %v58 = vsel %vm53, %v41, 0
    %60 = vmatprep.subr.mxu0 0.0
    %61 = vmatpush1.msra.mxu0 %v42
    %62 = vmatprep.subr.mxu0 0.0
    %63 = vmatpush1.msra.mxu0 %v43
    %64 = vmatprep.subr.mxu0 0.0
    %65 = vmatpush1.msra.mxu0 %v44
    %66 = vmatprep.subr.mxu0 0.0
    %67 = vmatpush1.msra.mxu0 %v45
    %68 = vmatprep.subr.mxu0 0.0
    %69 = vmatpush1.msra.mxu0 0.0
    %70 = vmatprep.subr.mxu0 0.0
    %71 = vmatpush1.msra.mxu0 0.0
    %72 = vmatprep.subr.mxu0 0.0
    %73 = vmatpush1.msra.mxu0 0.0
    %74 = vmatprep.subr.mxu0 0.0
    %75 = vmatpush1.msra.mxu0 0.0
    %76 = vmatprep.subr.mxu0 0.0
    %77 = vmatpush1.msra.mxu0 0.0
    %78 = vmatprep.subr.mxu0 0.0
    %79 = vmatpush1.msra.mxu0 0.0
    %80 = vmatprep.subr.mxu0 0.0
    %81 = vmatpush1.msra.mxu0 0.0
    %82 = vmatprep.subr.mxu0 0.0
    %83 = vmatpush1.msra.mxu0 0.0
    %84 = vmatprep.subr.mxu0 0.0
    %85 = vmatpush1.msra.mxu0 0.0
    %86 = vmatprep.subr.mxu0 0.0
    %87 = vmatpush1.msra.mxu0 0.0
    %88 = vmatprep.subr.mxu0 0.0
    %89 = vmatpush1.msra.mxu0 0.0
    %90 = vmatprep.subr.mxu0 0.0
    %91 = vmatpush1.msra.mxu0 0.0
    %92 = vmatprep.subr.mxu0 0.0
    %93 = vmatpush1.msra.mxu0 0.0
    %94 = vmatprep.subr.mxu0 0.0
    %95 = vmatpush1.msra.mxu0 0.0
    %96 = vmatprep.subr.mxu0 0.0
    %97 = vmatpush1.msra.mxu0 0.0
    %98 = vmatprep.subr.mxu0 0.0
    %99 = vmatpush1.msra.mxu0 0.0
    %100 = vmatprep.subr.mxu0 0.0
    %101 = vmatpush1.msra.mxu0 0.0
    %102 = vmatprep.subr.mxu0 0.0
    %103 = vmatpush1.msra.mxu0 0.0
    %104 = vmatprep.subr.mxu0 0.0
    %105 = vmatpush1.msra.mxu0 0.0
    %106 = vmatprep.subr.mxu0 0.0
    %107 = vmatpush1.msra.mxu0 0.0
    %108 = vmatprep.subr.mxu0 0.0
    %109 = vmatpush1.msra.mxu0 0.0
    %110 = vmatprep.subr.mxu0 0.0
    %111 = vmatpush1.msra.mxu0 0.0
    %112 = vmatprep.subr.mxu0 0.0
    %113 = vmatpush1.msra.mxu0 0.0
    %114 = vmatprep.subr.mxu0 0.0
    %115 = vmatpush1.msra.mxu0 0.0
    %116 = vmatprep.subr.mxu0 0.0
    %117 = vmatpush1.msra.mxu0 0.0
    %118 = vmatprep.subr.mxu0 0.0
    %119 = vmatpush1.msra.mxu0 0.0
    %120 = vmatprep.subr.mxu0 0.0
    %121 = vmatpush1.msra.mxu0 0.0
    %122 = vmatprep.subr.mxu0 0.0
    %123 = vmatpush1.msra.mxu0 0.0
    %124 = vmatprep.mubr.f32.mxu0 0.0
    %125 = vmatmul.mubr.f32.gmra.mrb[0].mxu0 %v55
    %v126 = vpop.f32.mrb[0].mxu0
    %v127 = vadd.f32 %v51, %v126
    %v128 = vpop.f32.mrb[0].mxu0
    %129 = vmatprep.mubr.f32.mxu0 0.0
    %130 = vmatmul.mubr.f32.gmra.mrb[0].mxu0 %v58
    %v131 = vpop.f32.mrb[0].mxu0
    %v132 = vadd.f32 %v51, %v131
    %v133 = vpop.f32.mrb[0].mxu0
    %134 = vdwg.mxu0
    %v135 = vmax.f32 %v127, 0.0
    %v136 = vmax.f32 %v132, 0.0
    %v137 = vld [vmem:[%s3] sm:$0xff]
    %v138 = vld [vmem:[%s3 + $0x8] sm:$0xff]
    %v139 = vld [vmem:[%s3 + $0x10] sm:$0xff]
    %v140 = vld [vmem:[%s3 + $0x18] sm:$0xff]
    %v141 = vld [vmem:[%s3 + $0x20] sm:$0xff]
    %v142 = vld [vmem:[%s3 + $0x28] sm:$0xff]
    %v143 = vld [vmem:[%s3 + $0x30] sm:$0xff]
    %v144 = vld [vmem:[%s3 + $0x38] sm:$0xff]
    %v145 = vld [vmem:[%s4] sm:$0x1]
    %v147 = vlaneseq
    %v148 = vshrl.u32 %v147, 7
    %v149 = vsub.s32 0, %v148
    %v150 = vrot.slane %v145, %v149
    %vm152 = vcmask 523264
    %v154 = vsel %vm152, %v135, 0
    %v157 = vsel %vm152, %v136, 0
    %159 = vmatprep.subr.mxu0 0.0
    %160 = vmatpush1.msra.mxu0 %v137
    %161 = vmatprep.subr.mxu0 0.0
    %162 = vmatpush1.msra.mxu0 %v138
    %163 = vmatprep.subr.mxu0 0.0
    %164 = vmatpush1.msra.mxu0 %v139
    %165 = vmatprep.subr.mxu0 0.0
    %166 = vmatpush1.msra.mxu0 %v140
    %167 = vmatprep.subr.mxu0 0.0
    %168 = vmatpush1.msra.mxu0 %v141
    %169 = vmatprep.subr.mxu0 0.0
    %170 = vmatpush1.msra.mxu0 %v142
    %171 = vmatprep.subr.mxu0 0.0
    %172 = vmatpush1.msra.mxu0 %v143
    %173 = vmatprep.subr.mxu0 0.0
    %174 = vmatpush1.msra.mxu0 %v144
    %175 = vmatprep.subr.mxu0 0.0
    %176 = vmatpush1.msra.mxu0 0.0
    %177 = vmatprep.subr.mxu0 0.0
    %178 = vmatpush1.msra.mxu0 0.0
    %179 = vmatprep.subr.mxu0 0.0
    %180 = vmatpush1.msra.mxu0 0.0
    %181 = vmatprep.subr.mxu0 0.0
    %182 = vmatpush1.msra.mxu0 0.0
    %183 = vmatprep.subr.mxu0 0.0
    %184 = vmatpush1.msra.mxu0 0.0
    %185 = vmatprep.subr.mxu0 0.0
    %186 = vmatpush1.msra.mxu0 0.0
    %187 = vmatprep.subr.mxu0 0.0
    %188 = vmatpush1.msra.mxu0 0.0
    %189 = vmatprep.subr.mxu0 0.0
    %190 = vmatpush1.msra.mxu0 0.0
    %191 = vmatprep.subr.mxu0 0.0
    %192 = vmatpush1.msra.mxu0 0.0
    %193 = vmatprep.subr.mxu0 0.0
    %194 = vmatpush1.msra.mxu0 0.0
    %195 = vmatprep.subr.mxu0 0.0
    %196 = vmatpush1.msra.mxu0 0.0
    %197 = vmatprep.subr.mxu0 0.0
    %198 = vmatpush1.msra.mxu0 0.0
    %199 = vmatprep.subr.mxu0 0.0
    %200 = vmatpush1.msra.mxu0 0.0
    %201 = vmatprep.subr.mxu0 0.0
    %202 = vmatpush1.msra.mxu0 0.0
    %203 = vmatprep.subr.mxu0 0.0
    %204 = vmatpush1.msra.mxu0 0.0
    %205 = vmatprep.subr.mxu0 0.0
    %206 = vmatpush1.msra.mxu0 0.0
    %207 = vmatprep.subr.mxu0 0.0
    %208 = vmatpush1.msra.mxu0 0.0
    %209 = vmatprep.subr.mxu0 0.0
    %210 = vmatpush1.msra.mxu0 0.0
    %211 = vmatprep.subr.mxu0 0.0
    %212 = vmatpush1.msra.mxu0 0.0
    %213 = vmatprep.subr.mxu0 0.0
    %214 = vmatpush1.msra.mxu0 0.0
    %215 = vmatprep.subr.mxu0 0.0
    %216 = vmatpush1.msra.mxu0 0.0
    %217 = vmatprep.subr.mxu0 0.0
    %218 = vmatpush1.msra.mxu0 0.0
    %219 = vmatprep.subr.mxu0 0.0
    %220 = vmatpush1.msra.mxu0 0.0
    %221 = vmatprep.subr.mxu0 0.0
    %222 = vmatpush1.msra.mxu0 0.0
    %223 = vmatprep.mubr.f32.mxu0 0.0
    %224 = vmatmul.mubr.f32.gmra.mrb[0].mxu0 %v154
    %v225 = vpop.f32.mrb[0].mxu0
    %v226 = vadd.f32 %v150, %v225
    %v227 = vpop.f32.mrb[0].mxu0
    %228 = vmatprep.mubr.f32.mxu0 0.0
    %229 = vmatmul.mubr.f32.gmra.mrb[0].mxu0 %v157
    %v230 = vpop.f32.mrb[0].mxu0
    %v231 = vadd.f32 %v150, %v230
    %v232 = vpop.f32.mrb[0].mxu0
    %233 = vdwg.mxu0
    %v234 = vmax.f32 %v226, 0.0
    %v235 = vmax.f32 %v231, 0.0
    %v236 = vld [vmem:[%s5] sm:$0xff]
    %v237 = vld [vmem:[%s5 + $0x8] sm:$0xff]
    %v238 = vld [vmem:[%s5 + $0x10] sm:$0xff]
    %v239 = vld [vmem:[%s5 + $0x18] sm:$0xff]
    %v240 = vld [vmem:[%s5 + $0x20] sm:$0xff]
    %v241 = vld [vmem:[%s5 + $0x28] sm:$0xff]
    %v242 = vld [vmem:[%s5 + $0x30] sm:$0xff]
    %v243 = vld [vmem:[%s5 + $0x38] sm:$0xff]
    %v244 = vld [vmem:[%s6] sm:$0x1]
    %v246 = vlaneseq
    %v247 = vshrl.u32 %v246, 7
    %v248 = vsub.s32 0, %v247
    %v249 = vrot.slane %v244, %v248
    %v252 = vsel %vm152, %v234, 0
    %v255 = vsel %vm152, %v235, 0
    %257 = vmatprep.subr.mxu0 0.0
    %258 = vmatpush1.msra.mxu0 %v236
    %259 = vmatprep.subr.mxu0 0.0
    %260 = vmatpush1.msra.mxu0 %v237
    %261 = vmatprep.subr.mxu0 0.0
    %262 = vmatpush1.msra.mxu0 %v238
    %263 = vmatprep.subr.mxu0 0.0
    %264 = vmatpush1.msra.mxu0 %v239
    %265 = vmatprep.subr.mxu0 0.0
    %266 = vmatpush1.msra.mxu0 %v240
    %267 = vmatprep.subr.mxu0 0.0
    %268 = vmatpush1.msra.mxu0 %v241
    %269 = vmatprep.subr.mxu0 0.0
    %270 = vmatpush1.msra.mxu0 %v242
    %271 = vmatprep.subr.mxu0 0.0
    %272 = vmatpush1.msra.mxu0 %v243
    %273 = vmatprep.subr.mxu0 0.0
    %274 = vmatpush1.msra.mxu0 0.0
    %275 = vmatprep.subr.mxu0 0.0
    %276 = vmatpush1.msra.mxu0 0.0
    %277 = vmatprep.subr.mxu0 0.0
    %278 = vmatpush1.msra.mxu0 0.0
    %279 = vmatprep.subr.mxu0 0.0
    %280 = vmatpush1.msra.mxu0 0.0
    %281 = vmatprep.subr.mxu0 0.0
    %282 = vmatpush1.msra.mxu0 0.0
    %283 = vmatprep.subr.mxu0 0.0
    %284 = vmatpush1.msra.mxu0 0.0
    %285 = vmatprep.subr.mxu0 0.0
    %286 = vmatpush1.msra.mxu0 0.0
    %287 = vmatprep.subr.mxu0 0.0
    %288 = vmatpush1.msra.mxu0 0.0
    %289 = vmatprep.subr.mxu0 0.0
    %290 = vmatpush1.msra.mxu0 0.0
    %291 = vmatprep.subr.mxu0 0.0
    %292 = vmatpush1.msra.mxu0 0.0
    %293 = vmatprep.subr.mxu0 0.0
    %294 = vmatpush1.msra.mxu0 0.0
    %295 = vmatprep.subr.mxu0 0.0
    %296 = vmatpush1.msra.mxu0 0.0
    %297 = vmatprep.subr.mxu0 0.0
    %298 = vmatpush1.msra.mxu0 0.0
    %299 = vmatprep.subr.mxu0 0.0
    %300 = vmatpush1.msra.mxu0 0.0
    %301 = vmatprep.subr.mxu0 0.0
    %302 = vmatpush1.msra.mxu0 0.0
    %303 = vmatprep.subr.mxu0 0.0
    %304 = vmatpush1.msra.mxu0 0.0
    %305 = vmatprep.subr.mxu0 0.0
    %306 = vmatpush1.msra.mxu0 0.0
    %307 = vmatprep.subr.mxu0 0.0
    %308 = vmatpush1.msra.mxu0 0.0
    %309 = vmatprep.subr.mxu0 0.0
    %310 = vmatpush1.msra.mxu0 0.0
    %311 = vmatprep.subr.mxu0 0.0
    %312 = vmatpush1.msra.mxu0 0.0
    %313 = vmatprep.subr.mxu0 0.0
    %314 = vmatpush1.msra.mxu0 0.0
    %315 = vmatprep.subr.mxu0 0.0
    %316 = vmatpush1.msra.mxu0 0.0
    %317 = vmatprep.subr.mxu0 0.0
    %318 = vmatpush1.msra.mxu0 0.0
    %319 = vmatprep.subr.mxu0 0.0
    %320 = vmatpush1.msra.mxu0 0.0
    %321 = vmatprep.mubr.f32.mxu0 0.0
    %322 = vmatmul.mubr.f32.gmra.mrb[0].mxu0 %v252
    %v323 = vpop.f32.mrb[0].mxu0
    %v324 = vadd.f32 %v249, %v323
    %v325 = vpop.f32.mrb[0].mxu0
    %326 = vmatprep.mubr.f32.mxu0 0.0
    %327 = vmatmul.mubr.f32.gmra.mrb[0].mxu0 %v255
    %v328 = vpop.f32.mrb[0].mxu0
    %v329 = vadd.f32 %v249, %v328
    %v330 = vpop.f32.mrb[0].mxu0
    %331 = vdwg.mxu0
    %vm332 = vcmask 64512
    %333 = vst.msk [vmem:[%s7] sm:$0xff] %vm332, %v324
    %334 = vst.msk [vmem:[%s7 + $0x8] sm:$0xff] %vm332, %v329
    // Predicated region
    $region34: #{tpu_custom_call.1} parent=1 // pred_check
      _
    $region35: #{tpu_custom_call.1} parent=1 // pred_check_branch
      %336 = sbr.rel (0) target = $region37
    $region36: #{tpu_custom_call.1} parent=1 // pred_region
      _
    $region37: #{tpu_custom_call.1} parent=1 // pred_fallthru
      _
    // Predicated region
    $region38: #{tpu_custom_call.1} parent=1 // pred_check
      _
    $region39: #{tpu_custom_call.1} parent=1 // pred_check_branch
      %338 = sbr.rel (0) target = $region41
    $region40: #{tpu_custom_call.1} parent=1 // pred_region
      _
    $region41: #{tpu_custom_call.1} parent=1 // pred_fallthru
      _
    %339 = vsyncpa [#allocation3], 1

</llo_original>
